<compile_context>
chip_gen: v5e
topology: v5e:2x2
jax: 0.10.0
libtpu: 0.0.40
codegen_flags: <defaults>
</compile_context>

<pallas_src>
import functools

import jax
import jax.numpy as jnp
from jax.experimental import pallas as pl
from jax.experimental.pallas import tpu as pltpu


def _round_up(x, m):
    return ((x + m - 1) // m) * m


# ----------------------------------------------------------------------------
# Pallas kernel: fused 2-hidden-layer MLP (+ output layer), BN pre-folded.
# ----------------------------------------------------------------------------
def meta_mlp_kernel(
    x_ref,    # (TB, Din)  concatenated [logits | image] features tile
    w1_ref,   # (Din, H1)  BN1-folded weight
    b1_ref,   # (1, H1)    BN1-folded bias (f32)
    w2_ref,   # (H1, H2)   BN2-folded weight
    b2_ref,   # (1, H2)    BN2-folded bias (f32)
    w3_ref,   # (H2, Cp)   output weight (lane-padded to Cp)
    b3_ref,   # (1, Cp)    output bias (f32, lane-padded)
    o_ref,    # (TB, Cp)   output tile (f32)
    *,
    compute_dtype,
):
    # layer 1: Linear(+folded BN) + ReLU   (Dropout = identity in eval mode)
    h = jnp.dot(x_ref[...], w1_ref[...], preferred_element_type=jnp.float32)
    h = jnp.maximum(h + b1_ref[...], 0.0).astype(compute_dtype)

    # layer 2: Linear(+folded BN) + ReLU
    h = jnp.dot(h, w2_ref[...], preferred_element_type=jnp.float32)
    h = jnp.maximum(h + b2_ref[...], 0.0).astype(compute_dtype)

    # output layer: Linear (lane-dense, padded to Cp columns)
    o_ref[...] = (
        jnp.dot(h, w3_ref[...], preferred_element_type=jnp.float32) + b3_ref[...]
    )


# ----------------------------------------------------------------------------
# Wrapper: BN folding, concat, padding, tiling, pallas_call.
# ----------------------------------------------------------------------------
def meta_learner_forward(logits_features, image_features, params, *,
                         use_bf16=True, batch_tile=None):
    N, Dl = logits_features.shape
    _, Di = image_features.shape
    H1 = params["w1"].shape[0]
    H2 = params["w2"].shape[0]
    C = params["w3"].shape[0]
    eps = 1e-5

    compute_dtype = jnp.bfloat16 if use_bf16 else jnp.float32

    # ---- fold eval-mode BatchNorm into the linear layers (exact) -----------
    def fold_bn(gamma, beta, mean, var):
        scale = gamma / jnp.sqrt(var + eps)
        shift = beta - mean * scale
        return scale, shift

    s1, t1 = fold_bn(params["bn1_gamma"], params["bn1_beta"],
                     params["bn1_mean"], params["bn1_var"])
    s2, t2 = fold_bn(params["bn2_gamma"], params["bn2_beta"],
                     params["bn2_mean"], params["bn2_var"])

    # PyTorch Linear: y = x @ W.T + b  ->  transpose to (in, out), fold BN.
    w1 = params["w1"].T * s1[None, :]                 # (Dl+Di, H1)
    b1 = (params["b1"] * s1 + t1).reshape(1, H1)      # (1, H1)
    w2 = params["w2"].T * s2[None, :]                 # (H1, H2)
    b2 = (params["b2"] * s2 + t2).reshape(1, H2)      # (1, H2)
    w3 = params["w3"].T                               # (H2, C)
    b3 = params["b3"].reshape(1, C)

    # ---- lane-dense output: pad classes to a multiple of 128 ----------------
    Cp = max(128, _round_up(C, 128))
    w3 = jnp.pad(w3, ((0, 0), (0, Cp - C)))
    b3 = jnp.pad(b3, ((0, 0), (0, Cp - C)))

    # ---- fuse the concat once in XLA (kernel sees a single input stream) ----
    Din = Dl + Di
    x = jnp.concatenate([logits_features, image_features], axis=1)  # (N, Din)

    # ---- batch tiling: fill the MXU, pad batch to a tile multiple -----------
    align = 16 if use_bf16 else 8
    if batch_tile is None:
        target = 256                      # >= MXU height on v5e/v6e/v7x
        steps = -(-N // target)           # ceil
        TB = _round_up(-(-N // steps), align)
    else:
        TB = _round_up(min(batch_tile, _round_up(N, align)), align)
    N_pad = _round_up(N, TB)
    if N_pad != N:
        x = jnp.pad(x, ((0, N_pad - N), (0, 0)))
    grid = (N_pad // TB,)

    # matmul operands in compute dtype; biases stay f32 (post-accumulation).
    x = x.astype(compute_dtype)
    w1 = w1.astype(compute_dtype)
    w2 = w2.astype(compute_dtype)
    w3 = w3.astype(compute_dtype)
    b1 = b1.astype(jnp.float32)
    b2 = b2.astype(jnp.float32)
    b3 = b3.astype(jnp.float32)

    def batch_spec(shape):
        return pl.BlockSpec(shape, lambda i: (i, 0))

    def full_spec(shape):
        return pl.BlockSpec(shape, lambda i: (0, 0))

    out = pl.pallas_call(
        functools.partial(meta_mlp_kernel, compute_dtype=compute_dtype),
        out_shape=jax.ShapeDtypeStruct((N_pad, Cp), jnp.float32),
        grid_spec=pltpu.PrefetchScalarGridSpec(
            num_scalar_prefetch=0,
            grid=grid,
            in_specs=[
                batch_spec((TB, Din)),   # x
                full_spec((Din, H1)),    # w1 (BN folded)
                full_spec((1, H1)),      # b1
                full_spec((H1, H2)),     # w2 (BN folded)
                full_spec((1, H2)),      # b2
                full_spec((H2, Cp)),     # w3 (lane-padded)
                full_spec((1, Cp)),      # b3
            ],
            out_specs=batch_spec((TB, Cp)),
        ),
        compiler_params=pltpu.CompilerParams(
            dimension_semantics=("parallel",),
        ),
    )(x, w1, b1, w2, b2, w3, b3)

    return out[:N, :C]


# ----------------------------------------------------------------------------
# Pure-JAX reference (mirrors the PyTorch eval-mode forward) for validation.
# ----------------------------------------------------------------------------
def reference_forward(logits_features, image_features, params):
    eps = 1e-5
    x = jnp.concatenate([logits_features, image_features], axis=1)

    def bn(x, g, b, m, v):
        return g * (x - m) / jnp.sqrt(v + eps) + b

    h = x @ params["w1"].T + params["b1"]
    h = bn(h, params["bn1_gamma"], params["bn1_beta"],
           params["bn1_mean"], params["bn1_var"])
    h = jnp.maximum(h, 0.0)
    h = h @ params["w2"].T + params["b2"]
    h = bn(h, params["bn2_gamma"], params["bn2_beta"],
           params["bn2_mean"], params["bn2_var"])
    h = jnp.maximum(h, 0.0)
    return h @ params["w3"].T + params["b3"]


# ----------------------------------------------------------------------------
# Deterministic parameter init + smoke test.
# ----------------------------------------------------------------------------
def init_params(key, logits_dim, image_dim, hidden_dims, num_classes):
    combined = logits_dim + image_dim
    h1, h2 = hidden_dims
    ks = jax.random.split(key, 10)

    def linear(k, out_dim, in_dim):
        bound = 1.0 / jnp.sqrt(in_dim)
        kw, kb = jax.random.split(k)
        w = jax.random.uniform(kw, (out_dim, in_dim), jnp.float32, -bound, bound)
        b = jax.random.uniform(kb, (out_dim,), jnp.float32, -bound, bound)
        return w, b

    w1, b1 = linear(ks[0], h1, combined)
    w2, b2 = linear(ks[1], h2, h1)
    w3, b3 = linear(ks[2], num_classes, h2)

    return {
        "w1": w1, "b1": b1,
        "bn1_gamma": 1.0 + 0.1 * jax.random.normal(ks[3], (h1,), jnp.float32),
        "bn1_beta": 0.1 * jax.random.normal(ks[4], (h1,), jnp.float32),
        "bn1_mean": 0.05 * jax.random.normal(ks[5], (h1,), jnp.float32),
        "bn1_var": 1.0 + 0.1 * jax.nn.softplus(jax.random.normal(ks[6], (h1,), jnp.float32)),
        "w2": w2, "b2": b2,
        "bn2_gamma": 1.0 + 0.1 * jax.random.normal(ks[7], (h2,), jnp.float32),
        "bn2_beta": 0.1 * jax.random.normal(ks[8], (h2,), jnp.float32),
        "bn2_mean": jnp.zeros((h2,), jnp.float32),
        "bn2_var": jnp.ones((h2,), jnp.float32),
        "w3": w3, "b3": b3,
    }


if __name__ == "__main__":
    # MetaLearner(logits_dim=8, image_features_dim=24, num_classes=10,
    #             config=MetaLearnerConfig(hidden_dims=[64, 32]))
    logits_dim, image_dim = 8, 24
    hidden_dims = (64, 32)
    num_classes = 10

    key = jax.random.PRNGKey(0)
    k_p, k_x1, k_x2 = jax.random.split(key, 3)
    params = init_params(k_p, logits_dim, image_dim, hidden_dims, num_classes)

    # --- small batch, f32 path: exact vs reference ---------------------------
    batch = 8
    x1 = jax.random.normal(k_x1, (batch, logits_dim), jnp.float32)
    x2 = jax.random.normal(k_x2, (batch, image_dim), jnp.float32)

    out_f32 = meta_learner_forward(x1, x2, params, use_bf16=False)
    out_f32 = jax.block_until_ready(out_f32)
    ref = reference_forward(x1, x2, params)
    assert out_f32.shape == (batch, num_classes)
    assert jnp.allclose(out_f32, ref, atol=1e-4, rtol=1e-4), "f32 mismatch vs reference"

    # --- small batch, bf16 matmul path (f32 accumulation) --------------------
    out_bf16 = meta_learner_forward(x1, x2, params, use_bf16=True)
    out_bf16 = jax.block_until_ready(out_bf16)
    assert out_bf16.shape == (batch, num_classes)
    assert jnp.allclose(out_bf16, ref, atol=5e-2, rtol=5e-2), "bf16 mismatch vs reference"

    # --- irregular larger batch: exercises batch padding + multi-step grid ---
    big = 300
    kx1b, kx2b = jax.random.split(jax.random.PRNGKey(1))
    x1b = jax.random.normal(kx1b, (big, logits_dim), jnp.float32)
    x2b = jax.random.normal(kx2b, (big, image_dim), jnp.float32)
    out_big = meta_learner_forward(x1b, x2b, params, use_bf16=True)
    out_big = jax.block_until_ready(out_big)
    ref_big = reference_forward(x1b, x2b, params)
    assert out_big.shape == (big, num_classes)
    assert jnp.allclose(out_big, ref_big, atol=5e-2, rtol=5e-2), "big-batch mismatch"

    print("KERNEL_OK")
</pallas_src>

<mosaic_0001>
module attributes {stable_mosaic.version = 11 : i64} {
  func.func @meta_mlp_kernel(%arg0: i32, %arg1: memref<8x32xf32, #tpu.memory_space<vmem>>, %arg2: memref<32x64xf32, #tpu.memory_space<vmem>>, %arg3: memref<1x64xf32, #tpu.memory_space<vmem>>, %arg4: memref<64x32xf32, #tpu.memory_space<vmem>>, %arg5: memref<1x32xf32, #tpu.memory_space<vmem>>, %arg6: memref<32x128xf32, #tpu.memory_space<vmem>>, %arg7: memref<1x128xf32, #tpu.memory_space<vmem>>, %arg8: memref<8x128xf32, #tpu.memory_space<vmem>>) attributes {dimension_semantics = [#tpu.dimension_semantics<parallel>], iteration_bounds = array<i64: 1>, scalar_prefetch = 0 : i64, scratch_operands = 0 : i64, tpu.core_type = #tpu.core_type<tc>, window_params = [{transform_indices = @transform_0, window_bounds = array<i64: 8, 32>}, {pipeline_mode = #tpu.pipeline_mode<synchronous>, transform_indices = @transform_1, window_bounds = array<i64: 32, 64>}, {pipeline_mode = #tpu.pipeline_mode<synchronous>, transform_indices = @transform_2, window_bounds = array<i64: 1, 64>}, {pipeline_mode = #tpu.pipeline_mode<synchronous>, transform_indices = @transform_3, window_bounds = array<i64: 64, 32>}, {pipeline_mode = #tpu.pipeline_mode<synchronous>, transform_indices = @transform_4, window_bounds = array<i64: 1, 32>}, {pipeline_mode = #tpu.pipeline_mode<synchronous>, transform_indices = @transform_5, window_bounds = array<i64: 32, 128>}, {pipeline_mode = #tpu.pipeline_mode<synchronous>, transform_indices = @transform_6, window_bounds = array<i64: 1, 128>}, {transform_indices = @transform_7, window_bounds = array<i64: 8, 128>}]} {
    %c0 = arith.constant 0 : index
    %c0_0 = arith.constant 0 : index
    %0 = vector.load %arg1[%c0, %c0_0] : memref<8x32xf32, #tpu.memory_space<vmem>>, vector<8x32xf32>
    %c0_1 = arith.constant 0 : index
    %c0_2 = arith.constant 0 : index
    %1 = vector.load %arg2[%c0_1, %c0_2] : memref<32x64xf32, #tpu.memory_space<vmem>>, vector<32x64xf32>
    %cst = arith.constant dense<0.000000e+00> : vector<8x64xf32>
    %2 = tpu.matmul %0, %1, %cst {dimension_numbers = #tpu.dot_dimension_numbers<[1], [0], [0], [1], [0, 0, 1, 1], [], []>} : vector<8x32xf32>, vector<32x64xf32>, vector<8x64xf32> -> vector<8x64xf32>
    %c0_3 = arith.constant 0 : index
    %c0_4 = arith.constant 0 : index
    %3 = vector.load %arg3[%c0_3, %c0_4] : memref<1x64xf32, #tpu.memory_space<vmem>>, vector<1x64xf32>
    %4 = vector.broadcast %3 : vector<1x64xf32> to vector<8x64xf32>
    %5 = arith.addf %2, %4 : vector<8x64xf32>
    %cst_5 = arith.constant 0.000000e+00 : f32
    %6 = vector.broadcast %cst_5 : f32 to vector<8x64xf32>
    %7 = arith.maximumf %5, %6 : vector<8x64xf32>
    %c0_6 = arith.constant 0 : index
    %c0_7 = arith.constant 0 : index
    %8 = vector.load %arg4[%c0_6, %c0_7] : memref<64x32xf32, #tpu.memory_space<vmem>>, vector<64x32xf32>
    %cst_8 = arith.constant dense<0.000000e+00> : vector<8x32xf32>
    %9 = tpu.matmul %7, %8, %cst_8 {dimension_numbers = #tpu.dot_dimension_numbers<[1], [0], [0], [1], [0, 0, 1, 1], [], []>} : vector<8x64xf32>, vector<64x32xf32>, vector<8x32xf32> -> vector<8x32xf32>
    %c0_9 = arith.constant 0 : index
    %c0_10 = arith.constant 0 : index
    %10 = vector.load %arg5[%c0_9, %c0_10] : memref<1x32xf32, #tpu.memory_space<vmem>>, vector<1x32xf32>
    %11 = vector.broadcast %10 : vector<1x32xf32> to vector<8x32xf32>
    %12 = arith.addf %9, %11 : vector<8x32xf32>
    %cst_11 = arith.constant 0.000000e+00 : f32
    %13 = vector.broadcast %cst_11 : f32 to vector<8x32xf32>
    %14 = arith.maximumf %12, %13 : vector<8x32xf32>
    %c0_12 = arith.constant 0 : index
    %c0_13 = arith.constant 0 : index
    %15 = vector.load %arg6[%c0_12, %c0_13] : memref<32x128xf32, #tpu.memory_space<vmem>>, vector<32x128xf32>
    %cst_14 = arith.constant dense<0.000000e+00> : vector<8x128xf32>
    %16 = tpu.matmul %14, %15, %cst_14 {dimension_numbers = #tpu.dot_dimension_numbers<[1], [0], [0], [1], [0, 0, 1, 1], [], []>} : vector<8x32xf32>, vector<32x128xf32>, vector<8x128xf32> -> vector<8x128xf32>
    %c0_15 = arith.constant 0 : index
    %c0_16 = arith.constant 0 : index
    %17 = vector.load %arg7[%c0_15, %c0_16] : memref<1x128xf32, #tpu.memory_space<vmem>>, vector<1x128xf32>
    %18 = vector.broadcast %17 : vector<1x128xf32> to vector<8x128xf32>
    %19 = arith.addf %16, %18 : vector<8x128xf32>
    %c0_17 = arith.constant 0 : index
    %c0_18 = arith.constant 0 : index
    %20 = vector.load %arg8[%c0_17, %c0_18] : memref<8x128xf32, #tpu.memory_space<vmem>>, vector<8x128xf32>
    tpu.vector_store %arg8[%c0_17, %c0_18], %19 {strides = array<i32>} : memref<8x128xf32, #tpu.memory_space<vmem>>, vector<8x128xf32>,
    return
  }
  func.func @transform_0(%arg0: i32) -> (i32, i32) {
    %c0_i32 = arith.constant 0 : i32
    %c0_i32_0 = arith.constant 0 : i32
    return %arg0, %c0_i32 : i32, i32
  }
  func.func @transform_1(%arg0: i32) -> (i32, i32) {
    %c0_i32 = arith.constant 0 : i32
    %c0_i32_0 = arith.constant 0 : i32
    %c0_i32_1 = arith.constant 0 : i32
    return %c0_i32, %c0_i32_0 : i32, i32
  }
  func.func @transform_2(%arg0: i32) -> (i32, i32) {
    %c0_i32 = arith.constant 0 : i32
    %c0_i32_0 = arith.constant 0 : i32
    %c0_i32_1 = arith.constant 0 : i32
    return %c0_i32, %c0_i32_0 : i32, i32
  }
  func.func @transform_3(%arg0: i32) -> (i32, i32) {
    %c0_i32 = arith.constant 0 : i32
    %c0_i32_0 = arith.constant 0 : i32
    %c0_i32_1 = arith.constant 0 : i32
    return %c0_i32, %c0_i32_0 : i32, i32
  }
  func.func @transform_4(%arg0: i32) -> (i32, i32) {
    %c0_i32 = arith.constant 0 : i32
    %c0_i32_0 = arith.constant 0 : i32
    %c0_i32_1 = arith.constant 0 : i32
    return %c0_i32, %c0_i32_0 : i32, i32
  }
  func.func @transform_5(%arg0: i32) -> (i32, i32) {
    %c0_i32 = arith.constant 0 : i32
    %c0_i32_0 = arith.constant 0 : i32
    %c0_i32_1 = arith.constant 0 : i32
    return %c0_i32, %c0_i32_0 : i32, i32
  }
  func.func @transform_6(%arg0: i32) -> (i32, i32) {
    %c0_i32 = arith.constant 0 : i32
    %c0_i32_0 = arith.constant 0 : i32
    %c0_i32_1 = arith.constant 0 : i32
    return %c0_i32, %c0_i32_0 : i32, i32
  }
  func.func @transform_7(%arg0: i32) -> (i32, i32) {
    %c0_i32 = arith.constant 0 : i32
    %c0_i32_0 = arith.constant 0 : i32
    return %arg0, %c0_i32 : i32, i32
  }
}

</mosaic_0001>

<llo_original>
// kernel: tpu_custom_call.1
$region0: #{tpu_custom_call.1}
  #allocation0 [shape = 'u32[]', space=smem, size = 0x4, offset = 0x4, fixed_abs, tag = 'smem constant byte address 0x4 - core index']
  #allocation1 [shape = 'u32[72,128]{1,0:T(1,128)}', space=vmem, size = 0x9000, scoped, tag = 'internal scratch']
  %s0 = inlined_call_operand.vmem [shape: f32[8,32], index: 0, kind: input, shape index: {}]
  %s1 = inlined_call_operand.vmem [shape: f32[32,64], index: 1, kind: input, shape index: {}]
  %s2 = inlined_call_operand.vmem [shape: f32[1,64], index: 2, kind: input, shape index: {}]
  %s3 = inlined_call_operand.vmem [shape: f32[64,32], index: 3, kind: input, shape index: {}]
  %s4 = inlined_call_operand.vmem [shape: f32[1,32], index: 4, kind: input, shape index: {}]
  %s5 = inlined_call_operand.vmem [shape: f32[32,128], index: 5, kind: input, shape index: {}]
  %s6 = inlined_call_operand.vmem [shape: f32[1,128], index: 6, kind: input, shape index: {}]
  %s7 = inlined_call_operand.hbm [shape: f32[8,128], index: 7, kind: output, shape index: {}]
  %s8 = sld [smem:[#allocation0]]
  $region38: #{tpu_custom_call.1} parent=0
    _
  %s10 = ssub.s32 1, %s8
  %s11 = scalar_select 0, %s10, %s8
  $region1: #{tpu_custom_call.1} parent=0
    #allocation2 [shape = 'u8[4096]{0}', space=vmem, size = 0x1000, scoped, tag = 'output window, operand 0, single buffered']
    #allocation3 [shape = 's32[1]{0}', space=sflag, size = 0x4, scoped, tag = 'scoped memory for tpu_custom_call.1']
    %12 = vsyncpa [#allocation3], 0
    // Predicated region
    $region2: #{tpu_custom_call.1} parent=1 // pred_check
      _
    $region3: #{tpu_custom_call.1} parent=1 // pred_check_branch
      %14 = sbr.rel (0) target = $region5
    $region4: #{tpu_custom_call.1} parent=1 // pred_region
      _
    $region5: #{tpu_custom_call.1} parent=1 // pred_fallthru
      _
    // Predicated region
    $region6: #{tpu_custom_call.1} parent=1 // pred_check
      _
    $region7: #{tpu_custom_call.1} parent=1 // pred_check_branch
      %16 = sbr.rel (0) target = $region9
    $region8: #{tpu_custom_call.1} parent=1 // pred_region
      _
    $region9: #{tpu_custom_call.1} parent=1 // pred_fallthru
      _
    // Predicated region
    $region10: #{tpu_custom_call.1} parent=1 // pred_check
      _
    $region11: #{tpu_custom_call.1} parent=1 // pred_check_branch
      %18 = sbr.rel (0) target = $region13
    $region12: #{tpu_custom_call.1} parent=1 // pred_region
      _
    $region13: #{tpu_custom_call.1} parent=1 // pred_fallthru
      _
    // Predicated region
    $region14: #{tpu_custom_call.1} parent=1 // pred_check
      _
    $region15: #{tpu_custom_call.1} parent=1 // pred_check_branch
      %20 = sbr.rel (0) target = $region17
    $region16: #{tpu_custom_call.1} parent=1 // pred_region
      _
    $region17: #{tpu_custom_call.1} parent=1 // pred_fallthru
      _
    // Predicated region
    $region18: #{tpu_custom_call.1} parent=1 // pred_check
      _
    $region19: #{tpu_custom_call.1} parent=1 // pred_check_branch
      %22 = sbr.rel (0) target = $region21
    $region20: #{tpu_custom_call.1} parent=1 // pred_region
      _
    $region21: #{tpu_custom_call.1} parent=1 // pred_fallthru
      _
    // Predicated region
    $region22: #{tpu_custom_call.1} parent=1 // pred_check
      _
    $region23: #{tpu_custom_call.1} parent=1 // pred_check_branch
      %24 = sbr.rel (0) target = $region25
    $region24: #{tpu_custom_call.1} parent=1 // pred_region
      _
    $region25: #{tpu_custom_call.1} parent=1 // pred_fallthru
      _
    // Predicated region
    $region26: #{tpu_custom_call.1} parent=1 // pred_check
      _
    $region27: #{tpu_custom_call.1} parent=1 // pred_check_branch
      %26 = sbr.rel (0) target = $region29
    $region28: #{tpu_custom_call.1} parent=1 // pred_region
      _
    $region29: #{tpu_custom_call.1} parent=1 // pred_fallthru
      _
    %v27 = vld [vmem:[%s0] sm:$0xff]
    %v28 = vld [vmem:[%s1] sm:$0xff]
    %v29 = vld [vmem:[%s1 + $0x8] sm:$0xff]
    %v30 = vld [vmem:[%s1 + $0x10] sm:$0xff]
    %v31 = vld [vmem:[%s1 + $0x18] sm:$0xff]
    %v32 = vld [vmem:[%s2] sm:$0x1]
    %v34 = vperm.slane %v32, 0
    %vm36 = vcmask 261120
    %v38 = vsel %vm36, %v27, 0
    %40 = vmatpush.msra.mxu0 0.0
    %41 = vmatpush.msra.mxu0 0.0
    %42 = vmatpush.msra.mxu0 0.0
    %43 = vmatpush.msra.mxu0 0.0
    %44 = vmatpush.msra.mxu0 0.0
    %45 = vmatpush.msra.mxu0 0.0
    %46 = vmatpush.msra.mxu0 0.0
    %47 = vmatpush.msra.mxu0 0.0
    %48 = vmatpush.msra.mxu0 0.0
    %49 = vmatpush.msra.mxu0 0.0
    %50 = vmatpush.msra.mxu0 0.0
    %51 = vmatpush.msra.mxu0 0.0
    %52 = vmatpush.msra.mxu0 %v31
    %53 = vmatpush.msra.mxu0 %v30
    %54 = vmatpush.msra.mxu0 %v29
    %55 = vmatpush.msra.mxu0 %v28
    %56 = vmatmul.f32.gmra.mxu0 %v38
    %v57 = vpop.f32.mrf.mxu0
    %v58 = vadd.f32 %v34, %v57
    %59 = vdwg.mxu0
    %v60 = vmax.f32 %v58, 0.0
    %v61 = vld [vmem:[%s3] sm:$0xff]
    %v62 = vld [vmem:[%s3 + $0x8] sm:$0xff]
    %v63 = vld [vmem:[%s3 + $0x10] sm:$0xff]
    %v64 = vld [vmem:[%s3 + $0x18] sm:$0xff]
    %v65 = vld [vmem:[%s3 + $0x20] sm:$0xff]
    %v66 = vld [vmem:[%s3 + $0x28] sm:$0xff]
    %v67 = vld [vmem:[%s3 + $0x30] sm:$0xff]
    %v68 = vld [vmem:[%s3 + $0x38] sm:$0xff]
    %v69 = vld [vmem:[%s4] sm:$0x1]
    %v71 = vperm.slane %v69, 0
    %vm73 = vcmask 523264
    %v75 = vsel %vm73, %v60, 0
    %77 = vmatpush.msra.mxu0 0.0
    %78 = vmatpush.msra.mxu0 0.0
    %79 = vmatpush.msra.mxu0 0.0
    %80 = vmatpush.msra.mxu0 0.0
    %81 = vmatpush.msra.mxu0 0.0
    %82 = vmatpush.msra.mxu0 0.0
    %83 = vmatpush.msra.mxu0 0.0
    %84 = vmatpush.msra.mxu0 0.0
    %85 = vmatpush.msra.mxu0 %v68
    %86 = vmatpush.msra.mxu0 %v67
    %87 = vmatpush.msra.mxu0 %v66
    %88 = vmatpush.msra.mxu0 %v65
    %89 = vmatpush.msra.mxu0 %v64
    %90 = vmatpush.msra.mxu0 %v63
    %91 = vmatpush.msra.mxu0 %v62
    %92 = vmatpush.msra.mxu0 %v61
    %93 = vmatmul.f32.gmra.mxu0 %v75
    %v94 = vpop.f32.mrf.mxu0
    %v95 = vadd.f32 %v71, %v94
    %96 = vdwg.mxu0
    %v97 = vmax.f32 %v95, 0.0
    %v98 = vld [vmem:[%s5] sm:$0xff]
    %v99 = vld [vmem:[%s5 + $0x8] sm:$0xff]
    %v100 = vld [vmem:[%s5 + $0x10] sm:$0xff]
    %v101 = vld [vmem:[%s5 + $0x18] sm:$0xff]
    %v102 = vld [vmem:[%s6] sm:$0x1]
    %v104 = vperm.slane %v102, 0
    %v107 = vsel %vm36, %v97, 0
    %109 = vmatpush.msra.mxu0 0.0
    %110 = vmatpush.msra.mxu0 0.0
    %111 = vmatpush.msra.mxu0 0.0
    %112 = vmatpush.msra.mxu0 0.0
    %113 = vmatpush.msra.mxu0 0.0
    %114 = vmatpush.msra.mxu0 0.0
    %115 = vmatpush.msra.mxu0 0.0
    %116 = vmatpush.msra.mxu0 0.0
    %117 = vmatpush.msra.mxu0 0.0
    %118 = vmatpush.msra.mxu0 0.0
    %119 = vmatpush.msra.mxu0 0.0
    %120 = vmatpush.msra.mxu0 0.0
    %121 = vmatpush.msra.mxu0 %v101
    %122 = vmatpush.msra.mxu0 %v100
    %123 = vmatpush.msra.mxu0 %v99
    %124 = vmatpush.msra.mxu0 %v98
    %125 = vmatmul.f32.gmra.mxu0 %v107
    %v126 = vpop.f32.mrf.mxu0
    %v127 = vadd.f32 %v104, %v126
    %128 = vdwg.mxu0
    %129 = vst [vmem:[#allocation2] sm:$0xff] %v127
    // Predicated region
    $region30: #{tpu_custom_call.1} parent=1 // pred_check
      _
    $region31: #{tpu_custom_call.1} parent=1 // pred_check_branch
      %131 = sbr.rel (0) target = $region33
    $region32: #{tpu_custom_call.1} parent=1 // pred_region
      %133 = vsyncadd [#allocation3], 0
      %s135 = sshll.u32 [#allocation2], 4
      %s136 = int_to_ptr.vmem [resolvable:$true] %s135
      %s137 = sshll.u32 %s7, 4
      %s138 = int_to_ptr.hbm [resolvable:$true] %s137
      %140 = dma.vmem_to_hbm [thread:$0]  %s136, 128, %s138, [#allocation3]
    $region33: #{tpu_custom_call.1} parent=1 // pred_fallthru
      _
    // Predicated region
    $region34: #{tpu_custom_call.1} parent=1 // pred_check
      _
    $region35: #{tpu_custom_call.1} parent=1 // pred_check_branch
      %142 = sbr.rel (0) target = $region37
    $region36: #{tpu_custom_call.1} parent=1 // pred_region
      %144 = dma.done [#allocation3], 128
    $region37: #{tpu_custom_call.1} parent=1 // pred_fallthru
      _
    %145 = vsyncpa [#allocation3], 1

</llo_original>
